<compile_context>
chip_gen: v6e
topology: v6e:2x2x1
jax: 0.10.0
libtpu: 0.0.40
codegen_flags: <defaults>
</compile_context>

<pallas_src>
import functools

import numpy as np
import jax
import jax.numpy as jnp
from jax import lax
from jax.experimental import pallas as pl
from jax.experimental.pallas import tpu as pltpu


def _round_up(n, m):
    return ((n + m - 1) // m) * m


_VMEM = pl.BlockSpec(memory_space=pltpu.MemorySpace.VMEM)


# ---------------------------------------------------------------------------
# Kernel 1: voxel coordinates  coors = floor((p - pc_min) * (1/voxel_size))
#           one fused launch for all classes; lane-dense [8, Np] layout.
# ---------------------------------------------------------------------------
def _voxelize_kernel(pts_ref, pcmin_ref, inv_vs_ref, out_ref):
    c = jnp.floor((pts_ref[...] - pcmin_ref[...]) * inv_vs_ref[...])
    out_ref[...] = c.astype(jnp.int32)


def voxelize_all_pallas(points_list, pc_min, voxel_size_list):
    """points_list: list of [N_c,3] f32 -> list of integer voxel coords [N_c,3]
    (x, y, z order), all classes voxelized in a single pallas_call."""
    C = len(points_list)
    Nmax = max(max((p.shape[0] for p in points_list), default=1), 1)
    blk = 1024 if Nmax > 1024 else max(128, _round_up(Nmax, 128))
    Np_ = max(blk, _round_up(Nmax, blk))

    pts = np.zeros((C, 8, Np_), np.float32)
    inv_vs = np.ones((C, 8, 1), np.float32)
    for c, (p, vs) in enumerate(zip(points_list, voxel_size_list)):
        n = p.shape[0]
        if n > 0:
            pts[c, 0, :n] = p[:, 0]
            pts[c, 1, :n] = p[:, 1]
            pts[c, 2, :n] = p[:, 2]
        inv_vs[c, :3, 0] = 1.0 / np.asarray(vs, np.float32)
    pcm = np.zeros((8, 1), np.float32)
    pcm[:3, 0] = pc_min

    out = pl.pallas_call(
        _voxelize_kernel,
        out_shape=jax.ShapeDtypeStruct((C, 8, Np_), jnp.int32),
        grid=(C, Np_ // blk),
        in_specs=[pl.BlockSpec((1, 8, blk), lambda c, i: (c, 0, i)),
                  pl.BlockSpec((8, 1), lambda c, i: (0, 0)),
                  pl.BlockSpec((1, 8, 1), lambda c, i: (c, 0, 0))],
        out_specs=pl.BlockSpec((1, 8, blk), lambda c, i: (c, 0, i)),
        compiler_params=pltpu.CompilerParams(
            dimension_semantics=("parallel", "parallel")),
    )(jnp.asarray(pts), jnp.asarray(pcm), jnp.asarray(inv_vs))
    out = np.asarray(jax.device_get(out))
    return [np.ascontiguousarray(out[c, :3, :points_list[c].shape[0]].T)
            for c in range(C)]


# ---------------------------------------------------------------------------
# Kernel 2: scatter_v2(mode='avg')  -- per-voxel mean via one-hot matmul.
#           Accumulator/output are lane-dense [8, Vp] (voxels on lanes).
#           grid = (voxel tiles [parallel], point-reduction tiles [arbitrary]);
#           counts folded into the matmul (pts channel 3 == 1.0).
# ---------------------------------------------------------------------------
def _scatter_mean_kernel(inv_ref, pts_ref, out_ref, acc_ref):
    j = pl.program_id(0)          # voxel tile
    k = pl.program_id(1)          # point (reduction) tile

    @pl.when(k == 0)
    def _():
        acc_ref[...] = jnp.zeros_like(acc_ref)

    Vt = acc_ref.shape[1]
    blk = pts_ref.shape[1]
    inv = inv_ref[...]                                              # [1, blk] i32
    v_iota = lax.broadcasted_iota(jnp.int32, (Vt, blk), 0) + j * Vt
    onehot = (v_iota == inv).astype(jnp.float32)                    # [Vt, blk]
    # contract the point (lane) axis of BOTH operands (q.kT-style MXU matmul)
    # -> lane-dense [8, Vt] partial sums; counts ride along in channel 3.
    acc_ref[...] += lax.dot_general(
        pts_ref[...], onehot, (((1,), (1,)), ((), ())),
        preferred_element_type=jnp.float32)

    @pl.when(k == pl.num_programs(1) - 1)
    def _():
        counts = acc_ref[3:4, :]                                    # folded counts
        out_ref[...] = acc_ref[...] / jnp.maximum(counts, 1.0)


def scatter_mean_pallas(points, inv_inds, num_voxels):
    N = points.shape[0]
    blk = 1024 if N > 1024 else max(128, _round_up(N, 128))
    Np_ = max(blk, _round_up(N, blk))
    Vp = max(128, _round_up(num_voxels, 128))
    Vt = 512 if Vp % 512 == 0 else (256 if Vp % 256 == 0 else 128)

    pts = np.zeros((8, Np_), np.float32)
    pts[0, :N] = points[:, 0]
    pts[1, :N] = points[:, 1]
    pts[2, :N] = points[:, 2]
    pts[3, :N] = 1.0                      # counts row, reduced by the same matmul
    inv = np.full((1, Np_), -1, np.int32)   # -1 pad -> one-hot row of zeros
    inv[0, :N] = inv_inds

    out = pl.pallas_call(
        _scatter_mean_kernel,
        out_shape=jax.ShapeDtypeStruct((8, Vp), jnp.float32),
        grid=(Vp // Vt, Np_ // blk),
        in_specs=[pl.BlockSpec((1, blk), lambda j, k: (0, k)),
                  pl.BlockSpec((8, blk), lambda j, k: (0, k))],
        out_specs=pl.BlockSpec((8, Vt), lambda j, k: (0, j)),
        scratch_shapes=[pltpu.VMEM((8, Vt), jnp.float32)],
        compiler_params=pltpu.CompilerParams(
            dimension_semantics=("parallel", "arbitrary"),
            vmem_limit_bytes=32 * 1024 * 1024),
    )(jnp.asarray(inv), jnp.asarray(pts))
    out = np.asarray(jax.device_get(out))
    return np.ascontiguousarray(out[:3, :num_voxels].T)


def scatter_v2_avg(points, coors):
    # TODO(synk): torch.unique / inverse-index construction has no clean Pallas
    # equivalent (dynamic output shape); kept in host glue on the small int32
    # coords array only.
    uniq, inv = np.unique(coors, axis=0, return_inverse=True)
    inv = inv.reshape(-1)
    voxels = scatter_mean_pallas(points, inv.astype(np.int32), uniq.shape[0])
    return voxels, uniq.astype(np.int64), inv.astype(np.int64)


def filter_almost_empty(coors, min_points):
    _, inv, cnt = np.unique(coors, axis=0, return_inverse=True, return_counts=True)
    cnt_per_point = cnt[inv.reshape(-1)]
    return cnt_per_point >= min_points


def modify_cluster_by_class(cluster_inds_list):
    new_list = []
    for i, inds in enumerate(cluster_inds_list):
        cls_pad = np.full((inds.shape[0], 1), i, dtype=inds.dtype)
        new_list.append(np.concatenate([cls_pad, inds], axis=1))
    return new_list


# ---------------------------------------------------------------------------
# Kernel 3: connected components -- xy adjacency (dist < thresh, same batch)
#           followed by MXU transitive closure.  The bf16 reach matrix lives
#           in a single VMEM scratch and is squared IN PLACE, row-block by
#           row-block (monotone 0->1 updates keep the result exact), with a
#           convergence early-exit flag in SMEM gating later passes.
# ---------------------------------------------------------------------------
def _ccl_kernel(col_ref, row_ref, out_ref, reach_ref, done_ref, *,
                dist, n_steps, row_blk):
    Vp = reach_ref.shape[0]
    thr2 = jnp.float32(dist * dist)
    xr = row_ref[0:1, :]
    yr = row_ref[1:2, :]
    br = row_ref[2:3, :]

    # adjacency (self-loops included), built per row block to bound VPU temps
    for r0 in range(0, Vp, row_blk):
        xc = col_ref[r0:r0 + row_blk, 0:1]
        yc = col_ref[r0:r0 + row_blk, 1:2]
        bc = col_ref[r0:r0 + row_blk, 2:3]
        dx = xc - xr
        dy = yc - yr
        adj = jnp.logical_and(dx * dx + dy * dy < thr2, bc == br)
        reach_ref[r0:r0 + row_blk, :] = adj.astype(jnp.bfloat16)   # exact 0/1

    done_ref[0] = jnp.int32(0)

    # Transitive closure: each pass at least squares the covered path length,
    # so ceil(log2(V)) passes suffice; the in-place (Gauss-Seidel style) update
    # only adds valid paths and converges at least as fast.  Early-exit once a
    # full pass makes no change (typical LiDAR graphs converge in 2-4 passes).
    for _ in range(n_steps):
        @pl.when(done_ref[0] == 0)
        def _():
            changed = jnp.float32(0.0)
            for r0 in range(0, Vp, row_blk):
                old = reach_ref[r0:r0 + row_blk, :]
                prod = jnp.dot(old, reach_ref[...],
                               preferred_element_type=jnp.float32)
                new = (prod > 0.0).astype(jnp.bfloat16)
                changed = changed + jnp.sum((new - old).astype(jnp.float32))
                reach_ref[r0:r0 + row_blk, :] = new
            done_ref[0] = (changed == 0.0).astype(jnp.int32)

    # label[j] = smallest member index of j's component (reach symmetric),
    # lane-dense [1, Vp]; iota/where temps bounded to one row block.
    big = jnp.float32(Vp + 10)
    lab = jnp.full((1, Vp), big, jnp.float32)
    for r0 in range(0, Vp, row_blk):
        blk_reach = reach_ref[r0:r0 + row_blk, :]
        iota_i = (lax.broadcasted_iota(jnp.float32, (row_blk, Vp), 0)
                  + jnp.float32(r0))
        cand = jnp.min(jnp.where(blk_reach > 0, iota_i, big),
                       axis=0, keepdims=True)
        lab = jnp.minimum(lab, cand)
    out_ref[...] = lab


def find_connected_components_pallas(points, batch_idx, dist):
    V = points.shape[0]
    Vp = max(256, _round_up(V, 256))       # 256-aligned for the MXU tile
    assert Vp < (1 << 24)                  # float32 labels exact up to 2^24
    row_blk = 256
    col = np.zeros((Vp, 4), np.float32)
    col[:V, 0] = points[:, 0]
    col[:V, 1] = points[:, 1]
    col[:V, 2] = batch_idx
    pad_step = max(100.0, 10.0 * float(dist))
    pad = np.arange(Vp - V, dtype=np.float32)
    col[V:, 0] = 1.0e6 + pad_step * pad    # pad nodes: isolated, far away
    col[V:, 1] = 1.0e6
    col[V:, 2] = -1.0
    row = np.ascontiguousarray(col.T)      # [4, Vp]
    n_steps = int(np.ceil(np.log2(max(V, 2))))
    kernel = functools.partial(_ccl_kernel, dist=float(dist),
                               n_steps=n_steps, row_blk=row_blk)
    out = pl.pallas_call(
        kernel,
        out_shape=jax.ShapeDtypeStruct((1, Vp), jnp.float32),
        in_specs=[_VMEM, _VMEM],
        out_specs=_VMEM,
        scratch_shapes=[pltpu.VMEM((Vp, Vp), jnp.bfloat16),
                        pltpu.SMEM((1,), jnp.int32)],
        compiler_params=pltpu.CompilerParams(
            vmem_limit_bytes=48 * 1024 * 1024),
    )(jnp.asarray(col), jnp.asarray(row))
    labels = np.asarray(jax.device_get(out))[0, :V]
    # relabel to consecutive component ids in order of smallest member index;
    # voxel rows are sorted by batch, so this reproduces the per-batch scipy
    # labelling + running base offsets of the reference code.
    _, comp = np.unique(labels, return_inverse=True)
    comp = comp.reshape(-1).astype(np.int32)
    assert len(np.unique(comp)) == comp.max() + 1
    return comp


# ---------------------------------------------------------------------------
# Kernel 4: SSG -- keypoint de-dup + radius assignment, batched over batches
#           (grid axis "parallel" => megacore on v7x).  Per-point count and
#           keypoint index come out of ONE small MXU matmul (f32 selector
#           passed as an input); all outputs are lane-dense rows, Kp padded
#           to 128 so the valid store is unmasked.
# ---------------------------------------------------------------------------
def _ssg_kernel(kp_col_ref, kp_row_ref, pts_row_ref, sel_ref,
                valid_ref, cntidx_ref, *, radius):
    kp_col = kp_col_ref[0]               # [Kp, 4]
    kp_row = kp_row_ref[0]               # [4, Kp]
    pts_row = pts_row_ref[0]             # [4, Np]
    Kp = kp_col.shape[0]
    xkc = kp_col[:, 0:1]
    ykc = kp_col[:, 1:2]
    xkr = kp_row[0:1, :]
    ykr = kp_row[1:2, :]
    # keypoint<->keypoint squared distance (symmetric)
    dxa = xkc - xkr
    dya = ykc - ykr
    kd2 = dxa * dxa + dya * dya
    thr2 = jnp.float32((2.0 * radius + 0.01) ** 2)
    near = kd2 < thr2
    row_i = lax.broadcasted_iota(jnp.int32, (Kp, Kp), 0)
    col_j = lax.broadcasted_iota(jnp.int32, (Kp, Kp), 1)
    # invalid[j] = near ANY earlier keypoint i<j (matches reference triangle mask)
    inval_row = jnp.max(jnp.logical_and(near, row_i < col_j).astype(jnp.float32),
                        axis=0, keepdims=True)                     # (1, Kp)
    valid_ref[0] = 1.0 - inval_row
    # same values, sublane layout, for masking the point assignment
    inval_col = jnp.max(jnp.logical_and(near, col_j < row_i).astype(jnp.float32),
                        axis=1, keepdims=True)                     # (Kp, 1)
    # keypoint -> point squared distance
    xp = pts_row[0:1, :]
    yp = pts_row[1:2, :]
    dxp = xkc - xp
    dyp = ykc - yp
    pd2 = dxp * dxp + dyp * dyp                                    # [Kp, Np]
    in_rf = jnp.logical_and(pd2 < jnp.float32(radius * radius),
                            inval_col < 0.5).astype(jnp.float32)
    # selector rows: row0 = ones (count), row1 = keypoint index, rows 2..7 = 0;
    # one tiny f32 MXU matmul replaces two sublane reductions (must stay f32:
    # index values up to Kp would not be exact in bf16).
    cntidx_ref[0] = jnp.dot(sel_ref[...], in_rf,
                            preferred_element_type=jnp.float32)    # (8, Np)


def _fps_indices(points, n):
    # TODO(synk): furthest_point_sample is a sequential data-dependent gather;
    # kept in host glue (deterministic greedy FPS starting from index 0).
    N = points.shape[0]
    idx = np.zeros(n, dtype=np.int64)
    min_d = np.full(N, np.inf, dtype=np.float64)
    last = 0
    for i in range(1, n):
        d = ((points - points[last]) ** 2).sum(1)
        min_d = np.minimum(min_d, d)
        last = int(np.argmax(min_d))
        idx[i] = last
    return idx


def ssg_pallas(points, batch_idx, num_fps, radius):
    """Single batched pallas_call over all batches (one launch per class)."""
    bsz = int(np.max(batch_idx)) + 1
    masks = [batch_idx == i for i in range(bsz)]
    kp_list, n_list = [], []
    for i in range(bsz):
        pts_b = points[masks[i]]
        n_b = pts_b.shape[0]
        if n_b == 0:
            kp_list.append(np.zeros((0, 3), np.float32))
            n_list.append(0)
            continue
        if num_fps >= n_b:
            kp = pts_b
        else:
            kp = pts_b[_fps_indices(pts_b, num_fps)]
        kp_list.append(np.asarray(kp, np.float32))
        n_list.append(n_b)

    Kmax = max(max((k.shape[0] for k in kp_list), default=1), 1)
    Nmax = max(max(n_list), 1)
    Kp = max(128, _round_up(Kmax, 128))    # 128 lanes -> unmasked valid store
    Np_ = max(128, _round_up(Nmax, 128))

    kp_col = np.zeros((bsz, Kp, 4), np.float32)
    kp_row = np.zeros((bsz, 4, Kp), np.float32)
    pts_row = np.zeros((bsz, 4, Np_), np.float32)
    for i in range(bsz):
        K = kp_list[i].shape[0]
        N = n_list[i]
        if K > 0:
            kp_col[i, :K, 0] = kp_list[i][:, 0]
            kp_col[i, :K, 1] = kp_list[i][:, 1]
        kp_col[i, K:, 0] = 1.0e7 + 100.0 * np.arange(Kp - K, dtype=np.float32)
        kp_col[i, K:, 1] = 1.0e7
        kp_row[i] = kp_col[i].T
        pts_b = points[masks[i]]
        if N > 0:
            pts_row[i, 0, :N] = pts_b[:, 0]
            pts_row[i, 1, :N] = pts_b[:, 1]
        pts_row[i, 0, N:] = -1.0e7 - 100.0 * np.arange(Np_ - N, dtype=np.float32)
        pts_row[i, 1, N:] = -1.0e7

    # constant selector matrix (shared across batches / grid steps)
    sel = np.zeros((8, Kp), np.float32)
    sel[0, :] = 1.0
    sel[1, :] = np.arange(Kp, dtype=np.float32)

    # TODO(synk): when bsz == 1 the point axis could be split onto the grid to
    # load both v7x TensorCores; with bsz >= 2 the batch axis already does.
    kernel = functools.partial(_ssg_kernel, radius=float(radius))
    valid, cntidx = pl.pallas_call(
        kernel,
        out_shape=(jax.ShapeDtypeStruct((bsz, 1, Kp), jnp.float32),
                   jax.ShapeDtypeStruct((bsz, 8, Np_), jnp.float32)),
        grid=(bsz,),
        in_specs=[pl.BlockSpec((1, Kp, 4), lambda b: (b, 0, 0)),
                  pl.BlockSpec((1, 4, Kp), lambda b: (b, 0, 0)),
                  pl.BlockSpec((1, 4, Np_), lambda b: (b, 0, 0)),
                  pl.BlockSpec((8, Kp), lambda b: (0, 0))],
        out_specs=(pl.BlockSpec((1, 1, Kp), lambda b: (b, 0, 0)),
                   pl.BlockSpec((1, 8, Np_), lambda b: (b, 0, 0))),
        compiler_params=pltpu.CompilerParams(
            dimension_semantics=("parallel",)),
    )(jnp.asarray(kp_col), jnp.asarray(kp_row), jnp.asarray(pts_row),
      jnp.asarray(sel))
    valid = np.asarray(jax.device_get(valid))
    cntidx = np.asarray(jax.device_get(cntidx))

    comp = np.full(points.shape[0], -2, dtype=np.int32)
    base = 0
    for i in range(bsz):
        mask = masks[i]
        if not mask.any():
            continue
        K = kp_list[i].shape[0]
        N = n_list[i]
        valid_b = valid[i, 0, :K] > 0.5
        cnt_b = cntidx[i, 0, :N]
        kp_idx_b = cntidx[i, 1, :N].astype(np.int64)
        assert (cnt_b <= 1.0 + 1e-3).all()        # in_radius_mask.sum(0) <= 1
        has = cnt_b > 0.5
        assert has.any()                          # valid_centers_mask.any()
        rank = np.cumsum(valid_b.astype(np.int64)) - 1
        this_inds = np.where(has, rank[np.clip(kp_idx_b, 0, K - 1)], -1).astype(np.int32)
        this_inds = this_inds.copy()
        this_inds[this_inds > -1] += base
        base = int(this_inds.max()) + 1
        comp[mask] = this_inds
    assert (comp > -2).all()
    return comp


# ---------------------------------------------------------------------------
# HybridAssigner (JAX/Pallas port)
# ---------------------------------------------------------------------------
class HybridAssigner:
    """Generates cluster centers per class and assigns points to clusters."""

    def __init__(self, point_cloud_range, cfg_per_class,
                 class_names=('Car', 'Cyclist', 'Pedestrian')):
        self.point_cloud_range = np.asarray(point_cloud_range, np.float32)
        self.class_names = list(class_names)
        self.cfg_per_class = cfg_per_class
        self.num_classes = len(self.class_names)

    def forward(self, points_list, batch_idx_list, gt_bboxes_3d=None,
                gt_labels_3d=None, origin_points=None):
        gt_bboxes_3d = None
        gt_labels_3d = None
        assert self.num_classes == len(self.class_names)
        if origin_points is None:
            origin_points = [None] * self.num_classes

        # One fused voxelize launch for all classes (single device sync).
        # TODO(synk): the remaining host round trips (np.unique inverse index,
        # FPS) force device<->host syncs between kernels and cannot be chained
        # on-device without a dynamic-shape unique.
        vsizes = [self.cfg_per_class[name]['cluster_voxel_size']
                  for name in self.class_names]
        coors_xyz_list = voxelize_all_pallas(points_list,
                                             self.point_cloud_range[:3], vsizes)

        cluster_inds_list, valid_mask_list = [], []
        for pts, bidx, cxyz, name, org in zip(points_list, batch_idx_list,
                                              coors_xyz_list, self.class_names,
                                              origin_points):
            coors = cxyz[:, [2, 1, 0]]                           # -> [z, y, x]
            coors = np.concatenate(
                [bidx[:, None].astype(coors.dtype), coors], 1)
            ci, vm = self.forward_single_class(pts, bidx, coors, name, org)
            cluster_inds_list.append(ci)
            valid_mask_list.append(vm)
        cluster_inds_list = modify_cluster_by_class(cluster_inds_list)
        return cluster_inds_list, valid_mask_list

    def forward_single_class(self, points, batch_idx, coors, class_name,
                             origin_points):
        assigner_type = self.cfg_per_class[class_name]['assigner_type']
        if assigner_type == 'ssg':
            return self.forward_ssg(points, batch_idx, coors, class_name,
                                    origin_points)
        elif assigner_type == 'ccl':
            return self.forward_ccl(points, batch_idx, coors, class_name,
                                    origin_points)

    def forward_ssg(self, points, batch_idx, coors, class_name, origin_points):
        cfg = self.cfg_per_class[class_name]
        voxels, voxel_coors, inv_inds = scatter_v2_avg(points, coors)
        cluster_inds_full = ssg_pallas(voxels, voxel_coors[:, 0],
                                       cfg['num_fps'], cfg['radius'])
        cluster_inds_per_point = cluster_inds_full[inv_inds]
        valid_pts_mask = cluster_inds_per_point > -1
        out = np.stack([batch_idx.astype(np.int32),
                        cluster_inds_per_point.astype(np.int32)], 1)
        return out[valid_pts_mask], valid_pts_mask

    def forward_ccl(self, points, batch_idx, coors, class_name, origin_points):
        cfg = self.cfg_per_class[class_name]
        valid_mask = filter_almost_empty(coors, cfg['min_points'])
        if not valid_mask.any():
            valid_mask = ~valid_mask
        points = points[valid_mask]
        batch_idx = batch_idx[valid_mask]
        coors = coors[valid_mask]
        sampled_centers, voxel_coors, inv_inds = scatter_v2_avg(points, coors)
        cluster_inds = find_connected_components_pallas(
            sampled_centers, voxel_coors[:, 0].astype(np.float32),
            cfg['connected_dist'])
        assert len(cluster_inds) == len(sampled_centers)
        cluster_inds_per_point = cluster_inds[inv_inds]
        out = np.stack([batch_idx.astype(np.int32),
                        cluster_inds_per_point.astype(np.int32)], 1)
        return out, valid_mask


# ---------------------------------------------------------------------------
if __name__ == "__main__":
    point_cloud_range = [-10.0, -10.0, -3.0, 10.0, 10.0, 3.0]
    cfg_per_class = {
        'Car': dict(assigner_type='ccl', cluster_voxel_size=[0.6, 0.6, 6.0],
                    min_points=1, connected_dist=1.2),
        'Cyclist': dict(assigner_type='ccl', cluster_voxel_size=[0.4, 0.4, 6.0],
                        min_points=1, connected_dist=0.8),
        'Pedestrian': dict(assigner_type='ssg', cluster_voxel_size=[0.3, 0.3, 6.0],
                           radius=1.0, num_fps=16),
    }
    class_names = ['Car', 'Cyclist', 'Pedestrian']
    assigner = HybridAssigner(point_cloud_range, cfg_per_class, class_names)

    key = jax.random.PRNGKey(0)
    n_per_class, bsz = 64, 2
    points_list, batch_idx_list = [], []
    for _ in class_names:
        key, k1, k2 = jax.random.split(key, 3)
        xy = jax.random.uniform(k1, (n_per_class, 2), minval=-8.0, maxval=8.0)
        z = jax.random.uniform(k2, (n_per_class, 1), minval=-2.0, maxval=2.0)
        pts = np.asarray(jnp.concatenate([xy, z], axis=1), np.float32)
        bidx = np.repeat(np.arange(bsz, dtype=np.int32), n_per_class // bsz)
        points_list.append(pts)
        batch_idx_list.append(bidx)

    cluster_inds_list, valid_mask_list = assigner.forward(points_list, batch_idx_list)

    result = ([jnp.asarray(c) for c in cluster_inds_list]
              + [jnp.asarray(v) for v in valid_mask_list])
    jax.block_until_ready(result)

    for c in cluster_inds_list:
        assert c.ndim == 2 and c.shape[1] == 3          # [class, batch, cluster_id]
    for v, n in zip(valid_mask_list, [n_per_class] * 3):
        assert v.shape[0] == n
    print("KERNEL_OK")
</pallas_src>

<mosaic_0001>
module attributes {stable_mosaic.version = 11 : i64} {
  func.func @_voxelize_kernel(%arg0: i32, %arg1: i32, %arg2: memref<1x8x128xf32, #tpu.memory_space<vmem>>, %arg3: memref<8x1xf32, #tpu.memory_space<vmem>>, %arg4: memref<1x8x1xf32, #tpu.memory_space<vmem>>, %arg5: memref<1x8x128xi32, #tpu.memory_space<vmem>>) attributes {dimension_semantics = [#tpu.dimension_semantics<parallel>, #tpu.dimension_semantics<parallel>], iteration_bounds = array<i64: 3, 1>, scalar_prefetch = 0 : i64, scratch_operands = 0 : i64, tpu.core_type = #tpu.core_type<tc>, window_params = [{transform_indices = @transform_0, window_bounds = array<i64: 1, 8, 128>}, {pipeline_mode = #tpu.pipeline_mode<synchronous>, transform_indices = @transform_1, window_bounds = array<i64: 8, 1>}, {transform_indices = @transform_2, window_bounds = array<i64: 1, 8, 1>}, {transform_indices = @transform_3, window_bounds = array<i64: 1, 8, 128>}]} {
    %c0 = arith.constant 0 : index
    %c0_0 = arith.constant 0 : index
    %c0_1 = arith.constant 0 : index
    %0 = vector.load %arg2[%c0, %c0_0, %c0_1] : memref<1x8x128xf32, #tpu.memory_space<vmem>>, vector<1x8x128xf32>
    %c0_2 = arith.constant 0 : index
    %c0_3 = arith.constant 0 : index
    %1 = vector.load %arg3[%c0_2, %c0_3] : memref<8x1xf32, #tpu.memory_space<vmem>>, vector<8x1xf32>
    %2 = vector.shape_cast %1 : vector<8x1xf32> to vector<1x8x1xf32>
    %3 = vector.broadcast %2 : vector<1x8x1xf32> to vector<1x8x128xf32>
    %4 = arith.subf %0, %3 : vector<1x8x128xf32>
    %c0_4 = arith.constant 0 : index
    %c0_5 = arith.constant 0 : index
    %c0_6 = arith.constant 0 : index
    %5 = vector.load %arg4[%c0_4, %c0_5, %c0_6] : memref<1x8x1xf32, #tpu.memory_space<vmem>>, vector<1x8x1xf32>
    %6 = vector.broadcast %5 : vector<1x8x1xf32> to vector<1x8x128xf32>
    %7 = arith.mulf %4, %6 : vector<1x8x128xf32>
    %8 = math.floor %7 : vector<1x8x128xf32>
    %9 = arith.fptosi %8 : vector<1x8x128xf32> to vector<1x8x128xi32>
    %c0_7 = arith.constant 0 : index
    %c0_8 = arith.constant 0 : index
    %c0_9 = arith.constant 0 : index
    %10 = vector.load %arg5[%c0_7, %c0_8, %c0_9] : memref<1x8x128xi32, #tpu.memory_space<vmem>>, vector<1x8x128xi32>
    tpu.vector_store %arg5[%c0_7, %c0_8, %c0_9], %9 {strides = array<i32>} : memref<1x8x128xi32, #tpu.memory_space<vmem>>, vector<1x8x128xi32>,
    return
  }
  func.func @transform_0(%arg0: i32, %arg1: i32) -> (i32, i32, i32) {
    %c0_i32 = arith.constant 0 : i32
    %c0_i32_0 = arith.constant 0 : i32
    return %arg0, %c0_i32, %arg1 : i32, i32, i32
  }
  func.func @transform_1(%arg0: i32, %arg1: i32) -> (i32, i32) {
    %c0_i32 = arith.constant 0 : i32
    %c0_i32_0 = arith.constant 0 : i32
    %c0_i32_1 = arith.constant 0 : i32
    return %c0_i32, %c0_i32_0 : i32, i32
  }
  func.func @transform_2(%arg0: i32, %arg1: i32) -> (i32, i32, i32) {
    %c0_i32 = arith.constant 0 : i32
    %c0_i32_0 = arith.constant 0 : i32
    %c0_i32_1 = arith.constant 0 : i32
    return %arg0, %c0_i32, %c0_i32_0 : i32, i32, i32
  }
  func.func @transform_3(%arg0: i32, %arg1: i32) -> (i32, i32, i32) {
    %c0_i32 = arith.constant 0 : i32
    %c0_i32_0 = arith.constant 0 : i32
    return %arg0, %c0_i32, %arg1 : i32, i32, i32
  }
}

</mosaic_0001>

<llo_original>
// kernel: tpu_custom_call.1
$region0: #{tpu_custom_call.1}
  #allocation0 [shape = 'u32[]', space=smem, size = 0x4, offset = 0x4, fixed_abs, tag = 'smem constant byte address 0x4 - core index']
  #allocation1 [shape = 'u32[144,128]{1,0:T(1,128)}', space=vmem, size = 0x12000, scoped, tag = 'internal scratch']
  %s0 = inlined_call_operand.vmem [shape: f32[3,8,128], index: 0, kind: input, shape index: {}]
  %s1 = inlined_call_operand.vmem [shape: f32[8,1], index: 1, kind: input, shape index: {}]
  %s2 = inlined_call_operand.vmem [shape: f32[3,8,1], index: 2, kind: input, shape index: {}]
  %s3 = inlined_call_operand.hbm [shape: s32[3,8,128], index: 3, kind: output, shape index: {}]
  %s4 = sld [smem:[#allocation0]]
  $region45: #{tpu_custom_call.1} parent=0
    _
  %s6 = ssub.s32 1, %s4
  %s7 = scalar_select 0, %s6, %s4
  $region1: #{tpu_custom_call.1} parent=0
    #allocation2 [shape = 'u8[8192]{0}', space=vmem, size = 0x2000, scoped, tag = 'output window, operand 0']
    #allocation3 [shape = 's32[2]{0}', space=sflag, size = 0x8, scoped, tag = 'scoped memory for tpu_custom_call.1']
    %8 = vsyncpa [#allocation3], 0
    %s9 = scalar_lea.sflag [#allocation3], 1
    %10 = vsyncpa %s9, 0
    loop: start=0, step=1, limit=5
    $region2: #{tpu_custom_call.1} parent=1 // loop_pre_header
      _
    $region3: #{tpu_custom_call.1} parent=1 // loop_header
      %s12 = sphi 0, %s16
      %p13 = scmp.ge.s32.totalorder %s12, 5
      %s19 = sphi 0, %s31
      %s20 = sphi 0, %s27
      %s21 = sphi 0, %s19
      %s22 = sphi 0, %s20
      %s23 = sphi 0, %s21
      %s24 = sphi 0, %s22
      %s36 = sphi 0, %s38
      %s39 = sphi 0, %s36
      %s40 = sphi 0, %s39
      %s56 = sphi 0, %s40
      %s60 = sphi 0, %s60
      %s62 = sphi 0, %s60
      %s63 = sphi 0, %s62
      %s77 = sphi 0, %s63
      %s83 = sphi 0, %s85
      %s86 = sphi 0, %s83
      %s87 = sphi 0, %s86
      %s103 = sphi 0, %s87
      %s111 = sphi 0, %s113
      %s114 = sphi 0, %s111
      %s115 = sphi 0, %s114
      %s131 = sphi 0, %s115
    $region4: #{tpu_custom_call.1} parent=1 // loop_header_branch
      %15 = sbr.rel (%p13) target = $region8
    $region5: #{tpu_custom_call.1} parent=1 // loop_body
      %s17 = ssub.s32 %s12, 1
      %s18 = ssub.s32 %s12, 2
      %s25 = sadd.s32 1, %s20
      %p26 = scmp.ge.s32.totalorder %s25, 1
      %s27 = scalar_select %p26, 0, %s25
      %s28 = sadd.s32 1, %s19
      %s29 = scalar_select %p26, %s28, %s19
      %p30 = scmp.ge.s32.totalorder %s29, 3
      %s31 = scalar_select %p30, 0, %s29
      %s32 = ssub.s32 %s19, %s31
      %s33 = ssub.s32 %s20, %s27
      %s34 = sor.u32 %s32, %s33
      %p35 = scmp.eq.s32.totalorder %s34, 0
      %s37 = sadd.s32 %s36, 1
      %s38 = scalar_select %p35, %s36, %s37
      %p41 = pneg %p35
      %p42 = scmp.eq.s32.totalorder %s12, 2
      %p43 = por %p41, %p42
      %p44 = scmp.ne.s32.totalorder %s36, %s39
      %p45 = scmp.eq.s32.totalorder %s12, 0
      %p46 = por %p44, %p45
      %p47 = scmp.ne.s32.totalorder %s36, %s39
      %p48 = scmp.eq.s32.totalorder %s17, 2
      %p49 = por %p47, %p48
      %p50 = scmp.ne.s32.totalorder %s39, %s40
      %p51 = scmp.eq.s32.totalorder %s17, 0
      %p52 = por %p50, %p51
      %p53 = scmp.ne.s32.totalorder %s39, %s40
      %p54 = scmp.eq.s32.totalorder %s18, 2
      %p55 = por %p53, %p54
      %p57 = scmp.ne.s32.totalorder %s40, %s56
      %p58 = scmp.eq.s32.totalorder %s18, 0
      %p59 = por %p57, %p58
      %s61 = sadd.s32 %s60, 1
      %p64 = scmp.eq.s32.totalorder %s12, 2
      %p65 = scmp.ne.s32.totalorder %s60, %s62
      %p66 = scmp.eq.s32.totalorder %s12, 0
      %p67 = por %p65, %p66
      %p68 = scmp.ne.s32.totalorder %s60, %s62
      %p69 = scmp.eq.s32.totalorder %s17, 2
      %p70 = por %p68, %p69
      %p71 = scmp.ne.s32.totalorder %s62, %s63
      %p72 = scmp.eq.s32.totalorder %s17, 0
      %p73 = por %p71, %p72
      %p74 = scmp.ne.s32.totalorder %s62, %s63
      %p75 = scmp.eq.s32.totalorder %s18, 2
      %p76 = por %p74, %p75
      %p78 = scmp.ne.s32.totalorder %s63, %s77
      %p79 = scmp.eq.s32.totalorder %s18, 0
      %p80 = por %p78, %p79
      %s81 = ssub.s32 %s19, %s31
      %p82 = scmp.eq.s32.totalorder %s81, 0
      %s84 = sadd.s32 %s83, 1
      %s85 = scalar_select %p82, %s83, %s84
      %p88 = pneg %p82
      %p89 = scmp.eq.s32.totalorder %s12, 2
      %p90 = por %p88, %p89
      %p91 = scmp.ne.s32.totalorder %s83, %s86
      %p92 = scmp.eq.s32.totalorder %s12, 0
      %p93 = por %p91, %p92
      %p94 = scmp.ne.s32.totalorder %s83, %s86
      %p95 = scmp.eq.s32.totalorder %s17, 2
      %p96 = por %p94, %p95
      %p97 = scmp.ne.s32.totalorder %s86, %s87
      %p98 = scmp.eq.s32.totalorder %s17, 0
      %p99 = por %p97, %p98
      %p100 = scmp.ne.s32.totalorder %s86, %s87
      %p101 = scmp.eq.s32.totalorder %s18, 2
      %p102 = por %p100, %p101
      %p104 = scmp.ne.s32.totalorder %s87, %s103
      %p105 = scmp.eq.s32.totalorder %s18, 0
      %p106 = por %p104, %p105
      %s107 = ssub.s32 %s19, %s31
      %s108 = ssub.s32 %s20, %s27
      %s109 = sor.u32 %s107, %s108
      %p110 = scmp.eq.s32.totalorder %s109, 0
      %s112 = sadd.s32 %s111, 1
      %s113 = scalar_select %p110, %s111, %s112
      %p116 = pneg %p110
      %p117 = scmp.eq.s32.totalorder %s12, 2
      %p118 = por %p116, %p117
      %p119 = scmp.ne.s32.totalorder %s111, %s114
      %p120 = scmp.eq.s32.totalorder %s12, 0
      %p121 = por %p119, %p120
      %p122 = scmp.ne.s32.totalorder %s111, %s114
      %p123 = scmp.eq.s32.totalorder %s17, 2
      %p124 = por %p122, %p123
      %p125 = scmp.ne.s32.totalorder %s114, %s115
      %p126 = scmp.eq.s32.totalorder %s17, 0
      %p127 = por %p125, %p126
      %p128 = scmp.ne.s32.totalorder %s114, %s115
      %p129 = scmp.eq.s32.totalorder %s18, 2
      %p130 = por %p128, %p129
      %p132 = scmp.ne.s32.totalorder %s115, %s131
      %p133 = scmp.eq.s32.totalorder %s18, 0
      %p134 = por %p132, %p133
      %p135 = scmp.le.s32.totalorder 1, %s12
      %p136 = scmp.lt.s32.totalorder %s12, 4
      %p137 = pnand %p135, %p136
      %p138 = pneg %p137
      // Predicated region
      $region9: #{tpu_custom_call.1} parent=5 // pred_check
        _
      $region10: #{tpu_custom_call.1} parent=5 // pred_check_branch
        %140 = sbr.rel (%p137) target = $region12
      $region11: #{tpu_custom_call.1} parent=5 // pred_region
        %s141 = ssub.s32 %s12, 1
        // Predicated region
        $region13: #{tpu_custom_call.1} parent=11 // pred_check
          %p142 = pneg %p73
        $region14: #{tpu_custom_call.1} parent=11 // pred_check_branch
          %144 = sbr.rel (%p142) target = $region16
        $region15: #{tpu_custom_call.1} parent=11 // pred_region
          _
        $region16: #{tpu_custom_call.1} parent=11 // pred_fallthru
          _
      $region12: #{tpu_custom_call.1} parent=5 // pred_fallthru
        _
      %p145 = scmp.lt.s32.totalorder %s12, 3
      // Predicated region
      $region17: #{tpu_custom_call.1} parent=5 // pred_check
        %p146 = pneg %p145
      $region18: #{tpu_custom_call.1} parent=5 // pred_check_branch
        %148 = sbr.rel (%p146) target = $region20
      $region19: #{tpu_custom_call.1} parent=5 // pred_region
        // Predicated region
        $region21: #{tpu_custom_call.1} parent=19 // pred_check
          %p149 = pneg %p46
        $region22: #{tpu_custom_call.1} parent=19 // pred_check_branch
          %151 = sbr.rel (%p149) target = $region24
        $region23: #{tpu_custom_call.1} parent=19 // pred_region
          %p152 = scmp.lt.s32.totalorder %s19, 2
          %s153 = scalar_select %p152, %s19, 2
          %p154 = scmp.lt.s32.totalorder %s20, 0
          %s155 = scalar_select %p154, %s20, 0
          %s156 = sadd.s32 %s155, %s153
          %s157 = smul.addr %s156, 8
          %s158 = scalar_lea.vmem %s0, %s157
        $region24: #{tpu_custom_call.1} parent=19 // pred_fallthru
          _
        // Predicated region
        $region25: #{tpu_custom_call.1} parent=19 // pred_check
          %p159 = pneg %p93
        $region26: #{tpu_custom_call.1} parent=19 // pred_check_branch
          %161 = sbr.rel (%p159) target = $region28
        $region27: #{tpu_custom_call.1} parent=19 // pred_region
          %p162 = scmp.lt.s32.totalorder %s19, 2
          %s163 = scalar_select %p162, %s19, 2
          %s164 = smul.addr %s163, 8
          %s165 = scalar_lea.vmem %s2, %s164
        $region28: #{tpu_custom_call.1} parent=19 // pred_fallthru
          _
      $region20: #{tpu_custom_call.1} parent=5 // pred_fallthru
        _
      %p166 = scmp.le.s32.totalorder 1, %s12
      %p167 = scmp.lt.s32.totalorder %s12, 4
      %p168 = pnand %p166, %p167
      %p169 = pneg %p168
      // Predicated region
      $region29: #{tpu_custom_call.1} parent=5 // pred_check
        _
      $region30: #{tpu_custom_call.1} parent=5 // pred_check_branch
        %171 = sbr.rel (%p168) target = $region32
      $region31: #{tpu_custom_call.1} parent=5 // pred_region
        %s172 = ssub.s32 %s12, 1
        %p173 = scmp.lt.s32.totalorder %s21, 2
        %s174 = scalar_select %p173, %s21, 2
        %p175 = scmp.lt.s32.totalorder %s22, 0
        %s176 = scalar_select %p175, %s22, 0
        %s177 = sadd.s32 %s176, %s174
        %s178 = smul.addr %s177, 8
        %s179 = scalar_lea.vmem %s0, %s178
        %p180 = pneg %p52
        %p181 = pneg %p49
        %p182 = pneg %p73
        %p183 = pneg %p70
        %p184 = scmp.lt.s32.totalorder %s21, 2
        %s185 = scalar_select %p184, %s21, 2
        %s186 = smul.addr %s185, 8
        %s187 = scalar_lea.vmem %s2, %s186
        %p188 = pneg %p99
        %p189 = pneg %p96
        %p190 = pneg %p127
        %p191 = pneg %p124
        %s192 = sand.u32 %s114, 1
        %s193 = scalar_lea.sflag [#allocation3], %s192
        %s194 = sand.u32 %s114, 1
        %s195 = smul.addr %s194, 8
        %s196 = scalar_lea.vmem [#allocation2], %s195
        %p197 = scmp.lt.s32.totalorder %s21, 2
        %s198 = scalar_select %p197, %s21, 2
        %p199 = scmp.lt.s32.totalorder %s22, 0
        %s200 = scalar_select %p199, %s22, 0
        %s201 = sadd.s32 %s200, %s198
        %s202 = smul.addr %s201, 8
        %s203 = scalar_lea.vmem %s0, %s202
        %p204 = scmp.lt.s32.totalorder %s21, 2
        %s205 = scalar_select %p204, %s21, 2
        %s206 = smul.addr %s205, 8
        %s207 = scalar_lea.vmem %s2, %s206
        %v208 = vld [vmem:[%s203] sm:$0xff]
        %v209 = vld [vmem:[%s1] sm:$0xff]
        %211 = vset.pattern.permute.xlu0 0
        %212 = vperm.xlu0 %211, %v209
        %v213 = vpop.permute.xlu0 %212
        %v215 = vsub.f32 %v208, %v213
        %v216 = vld [vmem:[%s207] sm:$0xff]
        %218 = vset.pattern.permute.xlu0 0
        %219 = vperm.xlu0 %218, %v216
        %v220 = vpop.permute.xlu0 %219
        %v222 = vmul.f32 %v215, %v220
        %v223 = vfloor.f32 %v222
        %v224 = vcvt.f32.s32.to.zero.pseudo %v223
        %225 = vst [vmem:[%s196] sm:$0xff] %v224
        %s226 = sand.u32 %s114, 1
        %s227 = scalar_lea.sflag [#allocation3], %s226
        %s228 = sand.u32 %s114, 1
        %s229 = smul.addr %s228, 8
        %s230 = scalar_lea.vmem [#allocation2], %s229
        // Predicated region
        $region33: #{tpu_custom_call.1} parent=31 // pred_check
          %p231 = pneg %p124
        $region34: #{tpu_custom_call.1} parent=31 // pred_check_branch
          %233 = sbr.rel (%p231) target = $region36
        $region35: #{tpu_custom_call.1} parent=31 // pred_region
          %s235 = ssub.s32 128, 128
          %236 = vsyncadd %s227, %s235
          %s237 = sadd.s32 %s22, %s21
          %s238 = smul.addr %s237, 128
          %s239 = scalar_lea.hbm %s3, %s238
          %s241 = sshll.u32 %s230, 4
          %s242 = int_to_ptr.vmem [resolvable:$true] %s241
          %244 = dma.vmem_to_hbm [thread:$0]  %s242, 128, %s239, %s227
        $region36: #{tpu_custom_call.1} parent=31 // pred_fallthru
          _
      $region32: #{tpu_custom_call.1} parent=5 // pred_fallthru
        _
      %p245 = scmp.le.s32.totalorder 2, %s12
      // Predicated region
      $region37: #{tpu_custom_call.1} parent=5 // pred_check
        %p246 = pneg %p245
      $region38: #{tpu_custom_call.1} parent=5 // pred_check_branch
        %248 = sbr.rel (%p246) target = $region40
      $region39: #{tpu_custom_call.1} parent=5 // pred_region
        %s249 = ssub.s32 %s12, 2
        // Predicated region
        $region41: #{tpu_custom_call.1} parent=39 // pred_check
          %p250 = pneg %p130
        $region42: #{tpu_custom_call.1} parent=39 // pred_check_branch
          %252 = sbr.rel (%p250) target = $region44
        $region43: #{tpu_custom_call.1} parent=39 // pred_region
          %s253 = sand.u32 %s115, 1
          %s254 = scalar_lea.sflag [#allocation3], %s253
          %s255 = sand.u32 %s115, 1
          %s256 = smul.addr %s255, 8
          %s257 = scalar_lea.vmem [#allocation2], %s256
          %258 = dma.done %s254, 128
        $region44: #{tpu_custom_call.1} parent=39 // pred_fallthru
          _
      $region40: #{tpu_custom_call.1} parent=5 // pred_fallthru
        _
    $region6: #{tpu_custom_call.1} parent=1 // loop_footer
      %s16 = sadd.s32 1, %s12
    $region7: #{tpu_custom_call.1} parent=1 // loop_footer_branch
      %11 = sbr.rel target = $region3
    $region8: #{tpu_custom_call.1} parent=1 // loop_exit
      _
    %259 = vsyncpa [#allocation3], 1
    %s260 = scalar_lea.sflag [#allocation3], 1
    %261 = vsyncpa %s260, 1

</llo_original>
